<compile_context>
chip_gen: v5e
topology: v5e:2x2
jax: 0.10.0
libtpu: 0.0.40
codegen_flags: <defaults>
</compile_context>

<pallas_src>
import functools

import jax
import jax.numpy as jnp
from jax.experimental import pallas as pl
from jax.experimental.pallas import tpu as pltpu


def _reparameter_kernel(x_ref, eps_ref, wp_ref, bp_ref, wml_ref, bml_ref,
                        z_ref, mu_ref, lv_ref, h_acc, *, hidden_dim):
    """One (block_b, block_k) step of the F->H projection; epilogue on last K."""
    k = pl.program_id(1)

    @pl.when(k == 0)
    def _init():
        h_acc[...] = jnp.zeros_like(h_acc)

    # Partial (block_b, H) contribution of the F->H projection.
    # bf16 operands on the MXU, f32 accumulation in VMEM scratch.
    h_acc[...] += jnp.dot(x_ref[...], wp_ref[...],
                          preferred_element_type=jnp.float32)

    @pl.when(k == pl.num_programs(1) - 1)
    def _epilogue():
        h = h_acc[...] + bp_ref[...]                         # f32 bias add
        # Fused mu|log_var projection: (block_b, H) @ (H, 2H) in one MXU pass.
        ml = jnp.dot(h.astype(wml_ref.dtype), wml_ref[...],
                     preferred_element_type=jnp.float32) + bml_ref[...]
        mu = ml[:, :hidden_dim]            # 128-aligned lane slices (no relayout)
        log_var = ml[:, hidden_dim:]
        std = jnp.exp(0.5 * log_var)       # EUP transcendental, f32
        z = mu + eps_ref[...] * std        # reparameterization trick, f32
        z_ref[...] = z.astype(z_ref.dtype)
        mu_ref[...] = mu.astype(mu_ref.dtype)
        lv_ref[...] = log_var.astype(lv_ref.dtype)


def prepare_params(params, *, compute_dtype=jnp.bfloat16):
    """One-time weight prep; persist the result as the stored parameters.

    - pre-transpose to (in, out) layout so the kernel never transposes (no XLU)
    - fuse mu / log_var weights into a single (H, 2H) projection
    - cast matmul weights to `compute_dtype` (biases stay f32)
    """
    wp, bp, wmu, bmu, wlv, blv = params
    H, Fdim = wp.shape
    assert wmu.shape == (H, H) and wlv.shape == (H, H)
    wp_t = jnp.transpose(wp).astype(compute_dtype)                        # (F, H)
    wml_t = jnp.concatenate([jnp.transpose(wmu), jnp.transpose(wlv)],
                            axis=1).astype(compute_dtype)                 # (H, 2H)
    bp_r = bp.reshape(1, H).astype(jnp.float32)
    bml_r = jnp.concatenate([bmu, blv]).reshape(1, 2 * H).astype(jnp.float32)
    return wp_t, bp_r, wml_t, bml_r


def reparameter_forward(x, prepared, eps, *, block_b=None, block_k=None,
                        vmem_limit_bytes=None):
    """Pallas forward for the Reparameter module.

    x:        (B, ...) input, flattened to (B, F) inside the wrapper.
    prepared: output of prepare_params (persisted; NOT re-prepared per call).
    eps:      (B, H) standard-normal noise (torch.normal equivalent).
    Returns (z, (mu, log_var)), all f32.
    """
    wp_t, bp_r, wml_t, bml_r = prepared
    Fdim, H = wp_t.shape
    compute_dtype = wp_t.dtype
    itemsize = wp_t.dtype.itemsize

    B = x.shape[0]
    xf = x.reshape(B, -1).astype(compute_dtype)      # flatten(1) + bf16 operands
    assert xf.shape[1] == Fdim
    assert eps.shape == (B, H)
    assert H % 128 == 0, \
        "hidden_dim must be a multiple of 128 (lane-dense mu/log_var slices & stores)"

    # --- tiling knobs --------------------------------------------------------
    if block_b is None:
        # Whole batch per step at small B.  At large B pick a multiple of 8
        # (f32 sublanes) that divides B; on v7x split the batch across the two
        # TensorCores only when per-core activation traffic outweighs the
        # duplicated weight fetch.
        block_b = B
    if block_k is None:
        # Single K step while the (F, H) weight (double-buffered) comfortably
        # fits VMEM; K-tile the contraction at production Fdim.
        block_k = Fdim if Fdim * H * itemsize <= (4 << 20) else min(Fdim, 512)
    assert B % block_b == 0, "block_b must divide B"
    assert Fdim % block_k == 0, "block_k must divide feature_dim"
    assert block_k == Fdim or block_k % 128 == 0

    nb = B // block_b
    nk = Fdim // block_k
    grid = (nb, nk)

    # --- BlockSpecs ----------------------------------------------------------
    x_spec = pl.BlockSpec((block_b, block_k), lambda b, k: (b, k))
    eps_spec = pl.BlockSpec((block_b, H), lambda b, k: (b, 0))
    wp_spec = pl.BlockSpec((block_k, H), lambda b, k: (k, 0))
    # NOTE: at production sizes, the constant specs below (index_map never
    # changes) can take pipeline_mode=pl.Buffered(1) to halve their VMEM
    # footprint (matters most within v7x's 64 MiB VMEM per TensorCore).
    bp_spec = pl.BlockSpec((1, H), lambda b, k: (0, 0))
    wml_spec = pl.BlockSpec((H, 2 * H), lambda b, k: (0, 0))
    bml_spec = pl.BlockSpec((1, 2 * H), lambda b, k: (0, 0))
    out_spec = pl.BlockSpec((block_b, H), lambda b, k: (b, 0))

    # --- VMEM budget & cost estimate ----------------------------------------
    if vmem_limit_bytes is None:
        tile_bytes = (block_b * block_k * itemsize        # x tile
                      + block_k * H * itemsize            # wp_t tile
                      + block_b * H * 4                   # eps
                      + H * 2 * H * itemsize              # wml_t
                      + 3 * H * 4                         # biases
                      + 3 * block_b * H * 4)              # z / mu / log_var
        scratch_bytes = block_b * H * 4
        vmem_limit_bytes = min(64 << 20,
                               max(16 << 20,
                                   2 * tile_bytes + scratch_bytes + (4 << 20)))

    cost = pl.CostEstimate(
        flops=2 * B * Fdim * H + 2 * B * H * (2 * H),
        transcendentals=B * H,
        bytes_accessed=(xf.size * itemsize + wp_t.size * itemsize
                        + wml_t.size * itemsize + eps.size * eps.dtype.itemsize
                        + bp_r.size * 4 + bml_r.size * 4 + 3 * B * H * 4),
    )

    kernel = functools.partial(_reparameter_kernel, hidden_dim=H)

    z, mu, lv = pl.pallas_call(
        kernel,
        out_shape=(jax.ShapeDtypeStruct((B, H), jnp.float32),
                   jax.ShapeDtypeStruct((B, H), jnp.float32),
                   jax.ShapeDtypeStruct((B, H), jnp.float32)),
        grid_spec=pltpu.PrefetchScalarGridSpec(
            num_scalar_prefetch=0,
            grid=grid,
            in_specs=[x_spec, eps_spec, wp_spec, bp_spec, wml_spec, bml_spec],
            out_specs=[out_spec, out_spec, out_spec],
            scratch_shapes=[pltpu.VMEM((block_b, H), jnp.float32)],
        ),
        compiler_params=pltpu.CompilerParams(
            dimension_semantics=("parallel", "arbitrary"),
            vmem_limit_bytes=vmem_limit_bytes),
        cost_estimate=cost,
    )(xf, eps, wp_t, bp_r, wml_t, bml_r)

    return z, (mu, lv)


# ----------------------------- references -----------------------------------
def _reference_mixed(x, params, eps, compute_dtype=jnp.bfloat16):
    """Pure-JAX reference mirroring the kernel's mixed-precision compute."""
    wp, bp, wmu, bmu, wlv, blv = params
    xf = x.reshape(x.shape[0], -1)
    q = lambda a: a.astype(compute_dtype).astype(jnp.float32)
    hp = jax.lax.Precision.HIGHEST
    h = jnp.dot(q(xf), q(wp.T), precision=hp) + bp
    hq = q(h)
    mu = jnp.dot(hq, q(wmu.T), precision=hp) + bmu
    lv = jnp.dot(hq, q(wlv.T), precision=hp) + blv
    z = mu + eps * jnp.exp(0.5 * lv)
    return z, mu, lv


def _reference_f32(x, params, eps):
    """Full-f32 reference mirroring the PyTorch forward."""
    wp, bp, wmu, bmu, wlv, blv = params
    xf = x.reshape(x.shape[0], -1)
    hp = jax.lax.Precision.HIGHEST
    h = jnp.dot(xf, wp.T, precision=hp) + bp
    mu = jnp.dot(h, wmu.T, precision=hp) + bmu
    lv = jnp.dot(h, wlv.T, precision=hp) + blv
    z = mu + eps * jnp.exp(0.5 * lv)
    return z, mu, lv


if __name__ == "__main__":
    B = 2
    x_shape = (B, 4, 16, 16)          # flattens to feature_dim = 1024
    feature_dim = 4 * 16 * 16
    hidden_dim = 128                  # multiple of 128 -> lane-dense outputs

    key = jax.random.PRNGKey(0)
    ks = jax.random.split(key, 8)

    wp = jax.random.normal(ks[0], (hidden_dim, feature_dim), jnp.float32) * 0.03
    bp = jax.random.normal(ks[1], (hidden_dim,), jnp.float32) * 0.03
    wmu = jax.random.normal(ks[2], (hidden_dim, hidden_dim), jnp.float32) * 0.05
    bmu = jax.random.normal(ks[3], (hidden_dim,), jnp.float32) * 0.05
    wlv = jax.random.normal(ks[4], (hidden_dim, hidden_dim), jnp.float32) * 0.05
    blv = jax.random.normal(ks[5], (hidden_dim,), jnp.float32) * 0.05
    params = (wp, bp, wmu, bmu, wlv, blv)

    x = jax.random.normal(ks[6], x_shape, jnp.float32)
    # torch.normal(mean=0, std=1, size=(B, hidden_dim)) equivalent, drawn in
    # the wrapper so the run is deterministic and checkable against the
    # reference.
    # TODO(synk): at production B draw eps in-kernel via pltpu.prng_seed +
    # pltpu.stateful_normal (drops the (B,H) eps DMA), at the cost of exact
    # reference comparison.
    eps = jax.random.normal(ks[7], (B, hidden_dim), jnp.float32)

    # One-time weight prep -- persist this; do NOT re-prepare per forward call.
    prepared = prepare_params(params)

    # Path 1: single K step (whole (F,H) weight resident, default at demo size).
    z, (mu, lv) = reparameter_forward(x, prepared, eps)
    # Path 2: K-tiled contraction (exercises the f32 accumulator / pl.when path
    # used at production feature_dim).
    z2, (mu2, lv2) = reparameter_forward(x, prepared, eps, block_k=256)
    jax.block_until_ready((z, mu, lv, z2, mu2, lv2))

    zm, mum, lvm = _reference_mixed(x, params, eps)
    zf, muf, lvf = _reference_f32(x, params, eps)

    assert z.shape == (B, hidden_dim)
    assert mu.shape == (B, hidden_dim) and lv.shape == (B, hidden_dim)

    checks = [
        (z, zm, "z"), (mu, mum, "mu"), (lv, lvm, "log_var"),
        (z2, zm, "z(k-tiled)"), (mu2, mum, "mu(k-tiled)"), (lv2, lvm, "log_var(k-tiled)"),
    ]
    for got, ref, name in checks:
        err = jnp.max(jnp.abs(got - ref))
        assert jnp.allclose(got, ref, rtol=2e-3, atol=2e-3), \
            f"{name} vs mixed-precision reference: max abs err {err}"

    # Loose sanity check against the full-f32 reference (bf16 operand rounding
    # is the expected gap, not a bug).
    for got, ref, name in ((z, zf, "z"), (mu, muf, "mu"), (lv, lvf, "log_var")):
        err = jnp.max(jnp.abs(got - ref))
        assert jnp.allclose(got, ref, rtol=3e-2, atol=3e-2), \
            f"{name} vs f32 reference: max abs err {err}"

    print("KERNEL_OK")
</pallas_src>

<mosaic_0001>
module attributes {stable_mosaic.version = 11 : i64} {
  func.func @_reparameter_kernel(%arg0: i32, %arg1: i32, %arg2: memref<2x1024xbf16, #tpu.memory_space<vmem>>, %arg3: memref<2x128xf32, #tpu.memory_space<vmem>>, %arg4: memref<1024x128xbf16, #tpu.memory_space<vmem>>, %arg5: memref<1x128xf32, #tpu.memory_space<vmem>>, %arg6: memref<128x256xbf16, #tpu.memory_space<vmem>>, %arg7: memref<1x256xf32, #tpu.memory_space<vmem>>, %arg8: memref<2x128xf32, #tpu.memory_space<vmem>>, %arg9: memref<2x128xf32, #tpu.memory_space<vmem>>, %arg10: memref<2x128xf32, #tpu.memory_space<vmem>>, %arg11: memref<2x128xf32, #tpu.memory_space<vmem>>) attributes {dimension_semantics = [#tpu.dimension_semantics<parallel>, #tpu.dimension_semantics<arbitrary>], iteration_bounds = array<i64: 1, 1>, scalar_prefetch = 0 : i64, scratch_operands = 1 : i64, tpu.core_type = #tpu.core_type<tc>, window_params = [{transform_indices = @transform_0, window_bounds = array<i64: 2, 1024>}, {transform_indices = @transform_1, window_bounds = array<i64: 2, 128>}, {transform_indices = @transform_2, window_bounds = array<i64: 1024, 128>}, {pipeline_mode = #tpu.pipeline_mode<synchronous>, transform_indices = @transform_3, window_bounds = array<i64: 1, 128>}, {pipeline_mode = #tpu.pipeline_mode<synchronous>, transform_indices = @transform_4, window_bounds = array<i64: 128, 256>}, {pipeline_mode = #tpu.pipeline_mode<synchronous>, transform_indices = @transform_5, window_bounds = array<i64: 1, 256>}, {transform_indices = @transform_6, window_bounds = array<i64: 2, 128>}, {transform_indices = @transform_7, window_bounds = array<i64: 2, 128>}, {transform_indices = @transform_8, window_bounds = array<i64: 2, 128>}]} {
    %c0_i32 = arith.constant 0 : i32
    %0 = arith.cmpi eq, %arg1, %c0_i32 : i32
    %1 = arith.extui %0 : i1 to i32
    %c0_i32_0 = arith.constant 0 : i32
    %2 = arith.cmpi ne, %1, %c0_i32_0 : i32
    scf.if %2 {
      %cst_10 = arith.constant 0.000000e+00 : f32
      %12 = vector.broadcast %cst_10 : f32 to vector<2x128xf32>
      %c0_11 = arith.constant 0 : index
      %c0_12 = arith.constant 0 : index
      %13 = vector.load %arg11[%c0_11, %c0_12] : memref<2x128xf32, #tpu.memory_space<vmem>>, vector<2x128xf32>
      tpu.vector_store %arg11[%c0_11, %c0_12], %12 {strides = array<i32>} : memref<2x128xf32, #tpu.memory_space<vmem>>, vector<2x128xf32>,
    } else {
    }
    %c0 = arith.constant 0 : index
    %c0_1 = arith.constant 0 : index
    %3 = vector.load %arg11[%c0, %c0_1] : memref<2x128xf32, #tpu.memory_space<vmem>>, vector<2x128xf32>
    %c0_2 = arith.constant 0 : index
    %c0_3 = arith.constant 0 : index
    %4 = vector.load %arg2[%c0_2, %c0_3] : memref<2x1024xbf16, #tpu.memory_space<vmem>>, vector<2x1024xbf16>
    %c0_4 = arith.constant 0 : index
    %c0_5 = arith.constant 0 : index
    %5 = vector.load %arg4[%c0_4, %c0_5] : memref<1024x128xbf16, #tpu.memory_space<vmem>>, vector<1024x128xbf16>
    %cst = arith.constant dense<0.000000e+00> : vector<2x128xf32>
    %6 = tpu.matmul %4, %5, %cst {dimension_numbers = #tpu.dot_dimension_numbers<[1], [0], [0], [1], [0, 0, 1, 1], [], []>} : vector<2x1024xbf16>, vector<1024x128xbf16>, vector<2x128xf32> -> vector<2x128xf32>
    %7 = arith.addf %3, %6 : vector<2x128xf32>
    %c0_6 = arith.constant 0 : index
    %c0_7 = arith.constant 0 : index
    %8 = vector.load %arg11[%c0_6, %c0_7] : memref<2x128xf32, #tpu.memory_space<vmem>>, vector<2x128xf32>
    tpu.vector_store %arg11[%c0_6, %c0_7], %7 {strides = array<i32>} : memref<2x128xf32, #tpu.memory_space<vmem>>, vector<2x128xf32>,
    %c0_i32_8 = arith.constant 0 : i32
    %9 = arith.cmpi eq, %arg1, %c0_i32_8 : i32
    %10 = arith.extui %9 : i1 to i32
    %c0_i32_9 = arith.constant 0 : i32
    %11 = arith.cmpi ne, %10, %c0_i32_9 : i32
    scf.if %11 {
      %c0_10 = arith.constant 0 : index
      %c0_11 = arith.constant 0 : index
      %12 = vector.load %arg11[%c0_10, %c0_11] : memref<2x128xf32, #tpu.memory_space<vmem>>, vector<2x128xf32>
      %c0_12 = arith.constant 0 : index
      %c0_13 = arith.constant 0 : index
      %13 = vector.load %arg5[%c0_12, %c0_13] : memref<1x128xf32, #tpu.memory_space<vmem>>, vector<1x128xf32>
      %14 = vector.broadcast %13 : vector<1x128xf32> to vector<2x128xf32>
      %15 = arith.addf %12, %14 : vector<2x128xf32>
      %16 = arith.truncf %15 : vector<2x128xf32> to vector<2x128xbf16>
      %c0_14 = arith.constant 0 : index
      %c0_15 = arith.constant 0 : index
      %17 = vector.load %arg6[%c0_14, %c0_15] : memref<128x256xbf16, #tpu.memory_space<vmem>>, vector<128x256xbf16>
      %cst_16 = arith.constant dense<0.000000e+00> : vector<2x256xf32>
      %18 = tpu.matmul %16, %17, %cst_16 {dimension_numbers = #tpu.dot_dimension_numbers<[1], [0], [0], [1], [0, 0, 1, 1], [], []>} : vector<2x128xbf16>, vector<128x256xbf16>, vector<2x256xf32> -> vector<2x256xf32>
      %c0_17 = arith.constant 0 : index
      %c0_18 = arith.constant 0 : index
      %19 = vector.load %arg7[%c0_17, %c0_18] : memref<1x256xf32, #tpu.memory_space<vmem>>, vector<1x256xf32>
      %20 = vector.broadcast %19 : vector<1x256xf32> to vector<2x256xf32>
      %21 = arith.addf %18, %20 : vector<2x256xf32>
      %22 = vector.extract_strided_slice %21 {offsets = [0, 0], sizes = [2, 128], strides = [1, 1]} : vector<2x256xf32> to vector<2x128xf32>
      %23 = vector.extract_strided_slice %21 {offsets = [0, 128], sizes = [2, 128], strides = [1, 1]} : vector<2x256xf32> to vector<2x128xf32>
      %cst_19 = arith.constant 5.000000e-01 : f32
      %24 = vector.broadcast %cst_19 : f32 to vector<2x128xf32>
      %25 = arith.mulf %24, %23 : vector<2x128xf32>
      %26 = math.exp %25 : vector<2x128xf32>
      %c0_20 = arith.constant 0 : index
      %c0_21 = arith.constant 0 : index
      %27 = vector.load %arg3[%c0_20, %c0_21] : memref<2x128xf32, #tpu.memory_space<vmem>>, vector<2x128xf32>
      %28 = arith.mulf %27, %26 : vector<2x128xf32>
      %29 = arith.addf %22, %28 : vector<2x128xf32>
      %c0_22 = arith.constant 0 : index
      %c0_23 = arith.constant 0 : index
      %30 = vector.load %arg8[%c0_22, %c0_23] : memref<2x128xf32, #tpu.memory_space<vmem>>, vector<2x128xf32>
      tpu.vector_store %arg8[%c0_22, %c0_23], %29 {strides = array<i32>} : memref<2x128xf32, #tpu.memory_space<vmem>>, vector<2x128xf32>,
      %c0_24 = arith.constant 0 : index
      %c0_25 = arith.constant 0 : index
      %31 = vector.load %arg9[%c0_24, %c0_25] : memref<2x128xf32, #tpu.memory_space<vmem>>, vector<2x128xf32>
      tpu.vector_store %arg9[%c0_24, %c0_25], %22 {strides = array<i32>} : memref<2x128xf32, #tpu.memory_space<vmem>>, vector<2x128xf32>,
      %c0_26 = arith.constant 0 : index
      %c0_27 = arith.constant 0 : index
      %32 = vector.load %arg10[%c0_26, %c0_27] : memref<2x128xf32, #tpu.memory_space<vmem>>, vector<2x128xf32>
      tpu.vector_store %arg10[%c0_26, %c0_27], %23 {strides = array<i32>} : memref<2x128xf32, #tpu.memory_space<vmem>>, vector<2x128xf32>,
    } else {
    }
    return
  }
  func.func @transform_0(%arg0: i32, %arg1: i32) -> (i32, i32) {
    %c0_i32 = arith.constant 0 : i32
    return %arg0, %arg1 : i32, i32
  }
  func.func @transform_1(%arg0: i32, %arg1: i32) -> (i32, i32) {
    %c0_i32 = arith.constant 0 : i32
    %c0_i32_0 = arith.constant 0 : i32
    return %arg0, %c0_i32 : i32, i32
  }
  func.func @transform_2(%arg0: i32, %arg1: i32) -> (i32, i32) {
    %c0_i32 = arith.constant 0 : i32
    %c0_i32_0 = arith.constant 0 : i32
    return %arg1, %c0_i32 : i32, i32
  }
  func.func @transform_3(%arg0: i32, %arg1: i32) -> (i32, i32) {
    %c0_i32 = arith.constant 0 : i32
    %c0_i32_0 = arith.constant 0 : i32
    %c0_i32_1 = arith.constant 0 : i32
    return %c0_i32, %c0_i32_0 : i32, i32
  }
  func.func @transform_4(%arg0: i32, %arg1: i32) -> (i32, i32) {
    %c0_i32 = arith.constant 0 : i32
    %c0_i32_0 = arith.constant 0 : i32
    %c0_i32_1 = arith.constant 0 : i32
    return %c0_i32, %c0_i32_0 : i32, i32
  }
  func.func @transform_5(%arg0: i32, %arg1: i32) -> (i32, i32) {
    %c0_i32 = arith.constant 0 : i32
    %c0_i32_0 = arith.constant 0 : i32
    %c0_i32_1 = arith.constant 0 : i32
    return %c0_i32, %c0_i32_0 : i32, i32
  }
  func.func @transform_6(%arg0: i32, %arg1: i32) -> (i32, i32) {
    %c0_i32 = arith.constant 0 : i32
    %c0_i32_0 = arith.constant 0 : i32
    return %arg0, %c0_i32 : i32, i32
  }
  func.func @transform_7(%arg0: i32, %arg1: i32) -> (i32, i32) {
    %c0_i32 = arith.constant 0 : i32
    %c0_i32_0 = arith.constant 0 : i32
    return %arg0, %c0_i32 : i32, i32
  }
  func.func @transform_8(%arg0: i32, %arg1: i32) -> (i32, i32) {
    %c0_i32 = arith.constant 0 : i32
    %c0_i32_0 = arith.constant 0 : i32
    return %arg0, %c0_i32 : i32, i32
  }
}

</mosaic_0001>

<llo_original>
// kernel: tpu_custom_call.1
$region0: #{tpu_custom_call.1}
  #allocation0 [shape = 'u32[]', space=smem, size = 0x4, offset = 0x4, fixed_abs, tag = 'smem constant byte address 0x4 - core index']
  #allocation1 [shape = 'u32[72,128]{1,0:T(1,128)}', space=vmem, size = 0x9000, scoped, tag = 'internal scratch']
  #allocation2 [shape = 'f32[2,128]{1,0:T(2,128)}', space=vmem, size = 0x400, scoped, tag = 'scratch operand']
  %s0 = inlined_call_operand.hbm [shape: bf16[2,1024], index: 0, kind: input, shape index: {}]
  %s1 = inlined_call_operand.hbm [shape: f32[2,128], index: 1, kind: input, shape index: {}]
  %s2 = inlined_call_operand.hbm [shape: bf16[1024,128], index: 2, kind: input, shape index: {}]
  %s3 = inlined_call_operand.vmem [shape: f32[1,128], index: 3, kind: input, shape index: {}]
  %s4 = inlined_call_operand.hbm [shape: bf16[128,256], index: 4, kind: input, shape index: {}]
  %s5 = inlined_call_operand.vmem [shape: f32[1,256], index: 5, kind: input, shape index: {}]
  %s6 = inlined_call_operand.hbm [shape: f32[2,128], index: 6, kind: output, shape index: {0}]
  %s7 = inlined_call_operand.hbm [shape: f32[2,128], index: 7, kind: output, shape index: {1}]
  %s8 = inlined_call_operand.hbm [shape: f32[2,128], index: 8, kind: output, shape index: {2}]
  %9 = xla_tuple %s6, %s7, %s8
  %s10 = sld [smem:[#allocation0]]
  $region74: #{tpu_custom_call.1} parent=0
    _
  %s12 = ssub.s32 1, %s10
  %s13 = scalar_select 0, %s12, %s10
  $region1: #{tpu_custom_call.1} parent=0
    #allocation3 [shape = 'u8[4096]{0}', space=vmem, size = 0x1000, scoped, tag = 'input window, operand 0, single buffered']
    #allocation4 [shape = 's32[1]{0}', space=sflag, size = 0x4, scoped, tag = 'scoped memory for tpu_custom_call.1']
    #allocation5 [shape = 's32[1]{0}', space=sflag, size = 0x4, scoped, tag = 'scoped memory for tpu_custom_call.1']
    #allocation6 [shape = 'u8[1024]{0}', space=vmem, size = 0x400, scoped, tag = 'input window, operand 1, single buffered']
    #allocation7 [shape = 's32[1]{0}', space=sflag, size = 0x4, scoped, tag = 'scoped memory for tpu_custom_call.1']
    #allocation8 [shape = 'u8[262144]{0}', space=vmem, size = 0x40000, scoped, tag = 'input window, operand 2, single buffered']
    #allocation9 [shape = 'u8[65536]{0}', space=vmem, size = 0x10000, scoped, tag = 'input window, operand 4, single buffered']
    #allocation10 [shape = 's32[1]{0}', space=sflag, size = 0x4, scoped, tag = 'scoped memory for tpu_custom_call.1']
    #allocation11 [shape = 'u8[1024]{0}', space=vmem, size = 0x400, scoped, tag = 'output window, operand 0, single buffered']
    #allocation12 [shape = 'u8[1024]{0}', space=vmem, size = 0x400, scoped, tag = 'output window, operand 1, single buffered']
    #allocation13 [shape = 's32[1]{0}', space=sflag, size = 0x4, scoped, tag = 'scoped memory for tpu_custom_call.1']
    #allocation14 [shape = 'u8[1024]{0}', space=vmem, size = 0x400, scoped, tag = 'output window, operand 2, single buffered']
    %14 = vsyncpa [#allocation4], 0
    %15 = vsyncpa [#allocation7], 0
    %16 = vsyncpa [#allocation10], 0
    %17 = vsyncpa [#allocation5], 0
    %18 = vsyncpa [#allocation13], 0
    // Predicated region
    $region2: #{tpu_custom_call.1} parent=1 // pred_check
      _
    $region3: #{tpu_custom_call.1} parent=1 // pred_check_branch
      %20 = sbr.rel (0) target = $region5
    $region4: #{tpu_custom_call.1} parent=1 // pred_region
      %22 = vsyncadd [#allocation4], 0
      %s24 = sshll.u32 %s0, 4
      %s25 = int_to_ptr.hbm [resolvable:$true] %s24
      %s26 = sshll.u32 [#allocation3], 4
      %s27 = int_to_ptr.vmem [resolvable:$true] %s26
      %29 = dma.hbm_to_vmem [thread:$0]  %s25, 128, %s27, [#allocation4]
    $region5: #{tpu_custom_call.1} parent=1 // pred_fallthru
      _
    // Predicated region
    $region6: #{tpu_custom_call.1} parent=1 // pred_check
      _
    $region7: #{tpu_custom_call.1} parent=1 // pred_check_branch
      %31 = sbr.rel (0) target = $region9
    $region8: #{tpu_custom_call.1} parent=1 // pred_region
      %33 = vsyncadd [#allocation7], 0
      %s35 = sshll.u32 %s1, 4
      %s36 = int_to_ptr.hbm [resolvable:$true] %s35
      %s37 = sshll.u32 [#allocation6], 4
      %s38 = int_to_ptr.vmem [resolvable:$true] %s37
      %40 = dma.hbm_to_vmem [thread:$0]  %s36, 32, %s38, [#allocation7]
    $region9: #{tpu_custom_call.1} parent=1 // pred_fallthru
      _
    // Predicated region
    $region10: #{tpu_custom_call.1} parent=1 // pred_check
      _
    $region11: #{tpu_custom_call.1} parent=1 // pred_check_branch
      %42 = sbr.rel (0) target = $region13
    $region12: #{tpu_custom_call.1} parent=1 // pred_region
      %44 = vsyncadd [#allocation7], 0
      %s45 = sshll.u32 %s2, 4
      %s46 = int_to_ptr.hbm [resolvable:$true] %s45
      %s47 = sshll.u32 [#allocation8], 4
      %s48 = int_to_ptr.vmem [resolvable:$true] %s47
      %53 = dma.hbm_to_vmem [thread:$0]  %s46, 8192, %s48, [#allocation7], 64, 64, 4
    $region13: #{tpu_custom_call.1} parent=1 // pred_fallthru
      _
    // Predicated region
    $region14: #{tpu_custom_call.1} parent=1 // pred_check
      _
    $region15: #{tpu_custom_call.1} parent=1 // pred_check_branch
      %55 = sbr.rel (0) target = $region17
    $region16: #{tpu_custom_call.1} parent=1 // pred_region
      _
    $region17: #{tpu_custom_call.1} parent=1 // pred_fallthru
      _
    // Predicated region
    $region18: #{tpu_custom_call.1} parent=1 // pred_check
      _
    $region19: #{tpu_custom_call.1} parent=1 // pred_check_branch
      %57 = sbr.rel (0) target = $region21
    $region20: #{tpu_custom_call.1} parent=1 // pred_region
      %59 = vsyncadd [#allocation10], 0
      %s60 = sshll.u32 %s4, 4
      %s61 = int_to_ptr.hbm [resolvable:$true] %s60
      %s62 = sshll.u32 [#allocation9], 4
      %s63 = int_to_ptr.vmem [resolvable:$true] %s62
      %68 = dma.hbm_to_vmem [thread:$0]  %s61, 2048, %s63, [#allocation10], 128, 128, 8
    $region21: #{tpu_custom_call.1} parent=1 // pred_fallthru
      _
    // Predicated region
    $region22: #{tpu_custom_call.1} parent=1 // pred_check
      _
    $region23: #{tpu_custom_call.1} parent=1 // pred_check_branch
      %70 = sbr.rel (0) target = $region25
    $region24: #{tpu_custom_call.1} parent=1 // pred_region
      _
    $region25: #{tpu_custom_call.1} parent=1 // pred_fallthru
      _
    // Predicated region
    $region26: #{tpu_custom_call.1} parent=1 // pred_check
      _
    $region27: #{tpu_custom_call.1} parent=1 // pred_check_branch
      %72 = sbr.rel (0) target = $region29
    $region28: #{tpu_custom_call.1} parent=1 // pred_region
      %74 = dma.done [#allocation4], 128
    $region29: #{tpu_custom_call.1} parent=1 // pred_fallthru
      _
    // Predicated region
    $region30: #{tpu_custom_call.1} parent=1 // pred_check
      _
    $region31: #{tpu_custom_call.1} parent=1 // pred_check_branch
      %76 = sbr.rel (0) target = $region33
    $region32: #{tpu_custom_call.1} parent=1 // pred_region
      %78 = dma.done [#allocation7], 32
    $region33: #{tpu_custom_call.1} parent=1 // pred_fallthru
      _
    // Predicated region
    $region34: #{tpu_custom_call.1} parent=1 // pred_check
      _
    $region35: #{tpu_custom_call.1} parent=1 // pred_check_branch
      %80 = sbr.rel (0) target = $region37
    $region36: #{tpu_custom_call.1} parent=1 // pred_region
      %82 = dma.done [#allocation7], 8192
    $region37: #{tpu_custom_call.1} parent=1 // pred_fallthru
      _
    // Predicated region
    $region38: #{tpu_custom_call.1} parent=1 // pred_check
      _
    $region39: #{tpu_custom_call.1} parent=1 // pred_check_branch
      %84 = sbr.rel (0) target = $region41
    $region40: #{tpu_custom_call.1} parent=1 // pred_region
      %86 = dma.done [#allocation10], 2048
    $region41: #{tpu_custom_call.1} parent=1 // pred_fallthru
      _
    %p87 = scmp.eq.s32.totalorder 0, 0
    // Predicated region
    $region42: #{tpu_custom_call.1} parent=1 // pred_check
      %p88 = pneg %p87
    $region43: #{tpu_custom_call.1} parent=1 // pred_check_branch
      %90 = sbr.rel (%p88) target = $region45
    $region44: #{tpu_custom_call.1} parent=1 // pred_region
      %91 = vst [vmem:[#allocation2] sm:$0x3] 0.0
    $region45: #{tpu_custom_call.1} parent=1 // pred_fallthru
      _
    %v92 = vld [vmem:[#allocation2] sm:$0x3]
    %v93 = vld [vmem:[#allocation3] sm:$0xff]
    %v94 = vld [vmem:[#allocation8] sm:$0xf]
    %v95 = vld [vmem:[#allocation8 + $0x4] sm:$0xf]
    %v96 = vld [vmem:[#allocation8 + $0x8] sm:$0xf]
    %v97 = vld [vmem:[#allocation8 + $0xc] sm:$0xf]
    %v98 = vld [vmem:[#allocation8 + $0x10] sm:$0xf]
    %v99 = vld [vmem:[#allocation8 + $0x14] sm:$0xf]
    %v100 = vld [vmem:[#allocation8 + $0x18] sm:$0xf]
    %v101 = vld [vmem:[#allocation8 + $0x1c] sm:$0xf]
    %v102 = vld [vmem:[#allocation8 + $0x20] sm:$0xf]
    %v103 = vld [vmem:[#allocation8 + $0x24] sm:$0xf]
    %v104 = vld [vmem:[#allocation8 + $0x28] sm:$0xf]
    %v105 = vld [vmem:[#allocation8 + $0x2c] sm:$0xf]
    %v106 = vld [vmem:[#allocation8 + $0x30] sm:$0xf]
    %v107 = vld [vmem:[#allocation8 + $0x34] sm:$0xf]
    %v108 = vld [vmem:[#allocation8 + $0x38] sm:$0xf]
    %v109 = vld [vmem:[#allocation8 + $0x3c] sm:$0xf]
    %v110 = vld [vmem:[#allocation8 + $0x40] sm:$0xf]
    %v111 = vld [vmem:[#allocation8 + $0x44] sm:$0xf]
    %v112 = vld [vmem:[#allocation8 + $0x48] sm:$0xf]
    %v113 = vld [vmem:[#allocation8 + $0x4c] sm:$0xf]
    %v114 = vld [vmem:[#allocation8 + $0x50] sm:$0xf]
    %v115 = vld [vmem:[#allocation8 + $0x54] sm:$0xf]
    %v116 = vld [vmem:[#allocation8 + $0x58] sm:$0xf]
    %v117 = vld [vmem:[#allocation8 + $0x5c] sm:$0xf]
    %v118 = vld [vmem:[#allocation8 + $0x60] sm:$0xf]
    %v119 = vld [vmem:[#allocation8 + $0x64] sm:$0xf]
    %v120 = vld [vmem:[#allocation8 + $0x68] sm:$0xf]
    %v121 = vld [vmem:[#allocation8 + $0x6c] sm:$0xf]
    %v122 = vld [vmem:[#allocation8 + $0x70] sm:$0xf]
    %v123 = vld [vmem:[#allocation8 + $0x74] sm:$0xf]
    %v124 = vld [vmem:[#allocation8 + $0x78] sm:$0xf]
    %v125 = vld [vmem:[#allocation8 + $0x7c] sm:$0xf]
    %v126 = vld [vmem:[#allocation8 + $0x80] sm:$0xf]
    %v127 = vld [vmem:[#allocation8 + $0x84] sm:$0xf]
    %v128 = vld [vmem:[#allocation8 + $0x88] sm:$0xf]
    %v129 = vld [vmem:[#allocation8 + $0x8c] sm:$0xf]
    %v130 = vld [vmem:[#allocation8 + $0x90] sm:$0xf]
    %v131 = vld [vmem:[#allocation8 + $0x94] sm:$0xf]
    %v132 = vld [vmem:[#allocation8 + $0x98] sm:$0xf]
    %v133 = vld [vmem:[#allocation8 + $0x9c] sm:$0xf]
    %v134 = vld [vmem:[#allocation8 + $0xa0] sm:$0xf]
    %v135 = vld [vmem:[#allocation8 + $0xa4] sm:$0xf]
    %v136 = vld [vmem:[#allocation8 + $0xa8] sm:$0xf]
    %v137 = vld [vmem:[#allocation8 + $0xac] sm:$0xf]
    %v138 = vld [vmem:[#allocation8 + $0xb0] sm:$0xf]
    %v139 = vld [vmem:[#allocation8 + $0xb4] sm:$0xf]
    %v140 = vld [vmem:[#allocation8 + $0xb8] sm:$0xf]
    %v141 = vld [vmem:[#allocation8 + $0xbc] sm:$0xf]
    %v142 = vld [vmem:[#allocation8 + $0xc0] sm:$0xf]
    %v143 = vld [vmem:[#allocation8 + $0xc4] sm:$0xf]
    %v144 = vld [vmem:[#allocation8 + $0xc8] sm:$0xf]
    %v145 = vld [vmem:[#allocation8 + $0xcc] sm:$0xf]
    %v146 = vld [vmem:[#allocation8 + $0xd0] sm:$0xf]
    %v147 = vld [vmem:[#allocation8 + $0xd4] sm:$0xf]
    %v148 = vld [vmem:[#allocation8 + $0xd8] sm:$0xf]
    %v149 = vld [vmem:[#allocation8 + $0xdc] sm:$0xf]
    %v150 = vld [vmem:[#allocation8 + $0xe0] sm:$0xf]
    %v151 = vld [vmem:[#allocation8 + $0xe4] sm:$0xf]
    %v152 = vld [vmem:[#allocation8 + $0xe8] sm:$0xf]
    %v153 = vld [vmem:[#allocation8 + $0xec] sm:$0xf]
    %v154 = vld [vmem:[#allocation8 + $0xf0] sm:$0xf]
    %v155 = vld [vmem:[#allocation8 + $0xf4] sm:$0xf]
    %v156 = vld [vmem:[#allocation8 + $0xf8] sm:$0xf]
    %v157 = vld [vmem:[#allocation8 + $0xfc] sm:$0xf]
    %v158 = vld [vmem:[#allocation8 + $0x100] sm:$0xf]
    %v159 = vld [vmem:[#allocation8 + $0x104] sm:$0xf]
    %v160 = vld [vmem:[#allocation8 + $0x108] sm:$0xf]
    %v161 = vld [vmem:[#allocation8 + $0x10c] sm:$0xf]
    %v162 = vld [vmem:[#allocation8 + $0x110] sm:$0xf]
    %v163 = vld [vmem:[#allocation8 + $0x114] sm:$0xf]
    %v164 = vld [vmem:[#allocation8 + $0x118] sm:$0xf]
    %v165 = vld [vmem:[#allocation8 + $0x11c] sm:$0xf]
    %v166 = vld [vmem:[#allocation8 + $0x120] sm:$0xf]
    %v167 = vld [vmem:[#allocation8 + $0x124] sm:$0xf]
    %v168 = vld [vmem:[#allocation8 + $0x128] sm:$0xf]
    %v169 = vld [vmem:[#allocation8 + $0x12c] sm:$0xf]
    %v170 = vld [vmem:[#allocation8 + $0x130] sm:$0xf]
    %v171 = vld [vmem:[#allocation8 + $0x134] sm:$0xf]
    %v172 = vld [vmem:[#allocation8 + $0x138] sm:$0xf]
    %v173 = vld [vmem:[#allocation8 + $0x13c] sm:$0xf]
    %v174 = vld [vmem:[#allocation8 + $0x140] sm:$0xf]
    %v175 = vld [vmem:[#allocation8 + $0x144] sm:$0xf]
    %v176 = vld [vmem:[#allocation8 + $0x148] sm:$0xf]
    %v177 = vld [vmem:[#allocation8 + $0x14c] sm:$0xf]
    %v178 = vld [vmem:[#allocation8 + $0x150] sm:$0xf]
    %v179 = vld [vmem:[#allocation8 + $0x154] sm:$0xf]
    %v180 = vld [vmem:[#allocation8 + $0x158] sm:$0xf]
    %v181 = vld [vmem:[#allocation8 + $0x15c] sm:$0xf]
    %v182 = vld [vmem:[#allocation8 + $0x160] sm:$0xf]
    %v183 = vld [vmem:[#allocation8 + $0x164] sm:$0xf]
    %v184 = vld [vmem:[#allocation8 + $0x168] sm:$0xf]
    %v185 = vld [vmem:[#allocation8 + $0x16c] sm:$0xf]
    %v186 = vld [vmem:[#allocation8 + $0x170] sm:$0xf]
    %v187 = vld [vmem:[#allocation8 + $0x174] sm:$0xf]
    %v188 = vld [vmem:[#allocation8 + $0x178] sm:$0xf]
    %v189 = vld [vmem:[#allocation8 + $0x17c] sm:$0xf]
    %v190 = vld [vmem:[#allocation8 + $0x180] sm:$0xf]
    %v191 = vld [vmem:[#allocation8 + $0x184] sm:$0xf]
    %v192 = vld [vmem:[#allocation8 + $0x188] sm:$0xf]
    %v193 = vld [vmem:[#allocation8 + $0x18c] sm:$0xf]
    %v194 = vld [vmem:[#allocation8 + $0x190] sm:$0xf]
    %v195 = vld [vmem:[#allocation8 + $0x194] sm:$0xf]
    %v196 = vld [vmem:[#allocation8 + $0x198] sm:$0xf]
    %v197 = vld [vmem:[#allocation8 + $0x19c] sm:$0xf]
    %v198 = vld [vmem:[#allocation8 + $0x1a0] sm:$0xf]
    %v199 = vld [vmem:[#allocation8 + $0x1a4] sm:$0xf]
    %v200 = vld [vmem:[#allocation8 + $0x1a8] sm:$0xf]
    %v201 = vld [vmem:[#allocation8 + $0x1ac] sm:$0xf]
    %v202 = vld [vmem:[#allocation8 + $0x1b0] sm:$0xf]
    %v203 = vld [vmem:[#allocation8 + $0x1b4] sm:$0xf]
    %v204 = vld [vmem:[#allocation8 + $0x1b8] sm:$0xf]
    %v205 = vld [vmem:[#allocation8 + $0x1bc] sm:$0xf]
    %v206 = vld [vmem:[#allocation8 + $0x1c0] sm:$0xf]
    %v207 = vld [vmem:[#allocation8 + $0x1c4] sm:$0xf]
    %v208 = vld [vmem:[#allocation8 + $0x1c8] sm:$0xf]
    %v209 = vld [vmem:[#allocation8 + $0x1cc] sm:$0xf]
    %v210 = vld [vmem:[#allocation8 + $0x1d0] sm:$0xf]
    %v211 = vld [vmem:[#allocation8 + $0x1d4] sm:$0xf]
    %v212 = vld [vmem:[#allocation8 + $0x1d8] sm:$0xf]
    %v213 = vld [vmem:[#allocation8 + $0x1dc] sm:$0xf]
    %v214 = vld [vmem:[#allocation8 + $0x1e0] sm:$0xf]
    %v215 = vld [vmem:[#allocation8 + $0x1e4] sm:$0xf]
    %v216 = vld [vmem:[#allocation8 + $0x1e8] sm:$0xf]
    %v217 = vld [vmem:[#allocation8 + $0x1ec] sm:$0xf]
    %v218 = vld [vmem:[#allocation8 + $0x1f0] sm:$0xf]
    %v219 = vld [vmem:[#allocation8 + $0x1f4] sm:$0xf]
    %v220 = vld [vmem:[#allocation8 + $0x1f8] sm:$0xf]
    %v221 = vld [vmem:[#allocation8 + $0x1fc] sm:$0xf]
    %223 = vst [vmem:[#allocation1] ss:$9 sm:$0xff] %v93
    %v224 = vld [vmem:[#allocation1] sm:$0xff]
    %v225 = vld [vmem:[#allocation1 + $0x9] sm:$0xff]
    %v226 = vld [vmem:[#allocation1 + $0x12] sm:$0xff]
    %v227 = vld [vmem:[#allocation1 + $0x1b] sm:$0xff]
    %v228 = vld [vmem:[#allocation1 + $0x24] sm:$0xff]
    %v229 = vld [vmem:[#allocation1 + $0x2d] sm:$0xff]
    %v230 = vld [vmem:[#allocation1 + $0x36] sm:$0xff]
    %v231 = vld [vmem:[#allocation1 + $0x3f] sm:$0xff]
    %v368 = vunpack.c.l.b16 %v94
    %v369 = vunpack.c.l.b16 %v95
    %v370 = vunpack.c.l.b16 %v96
    %v371 = vunpack.c.l.b16 %v97
    %v372 = vunpack.c.l.b16 %v98
    %v373 = vunpack.c.l.b16 %v99
    %v374 = vunpack.c.l.b16 %v100
    %v375 = vunpack.c.l.b16 %v101
    %v376 = vunpack.c.l.b16 %v102
    %v377 = vunpack.c.l.b16 %v103
    %v378 = vunpack.c.l.b16 %v104
    %v379 = vunpack.c.l.b16 %v105
    %v380 = vunpack.c.l.b16 %v106
    %v381 = vunpack.c.l.b16 %v107
    %v382 = vunpack.c.l.b16 %v108
    %v383 = vunpack.c.l.b16 %v109
    %v384 = vunpack.c.l.b16 %v110
    %v385 = vunpack.c.l.b16 %v111
    %v386 = vunpack.c.l.b16 %v112
    %v387 = vunpack.c.l.b16 %v113
    %v388 = vunpack.c.l.b16 %v114
    %v389 = vunpack.c.l.b16 %v115
    %v390 = vunpack.c.l.b16 %v116
    %v391 = vunpack.c.l.b16 %v117
    %v392 = vunpack.c.l.b16 %v118
    %v393 = vunpack.c.l.b16 %v119
    %v394 = vunpack.c.l.b16 %v120
    %v395 = vunpack.c.l.b16 %v121
    %v396 = vunpack.c.l.b16 %v122
    %v397 = vunpack.c.l.b16 %v123
    %v398 = vunpack.c.l.b16 %v124
    %v399 = vunpack.c.l.b16 %v125
    %v400 = vunpack.c.l.b16 %v126
    %v401 = vunpack.c.l.b16 %v127
    %v402 = vunpack.c.l.b16 %v128
    %v403 = vunpack.c.l.b16 %v129
    %v404 = vunpack.c.l.b16 %v130
    %v405 = vunpack.c.l.b16 %v131
    %v406 = vunpack.c.l.b16 %v132
    %v407 = vunpack.c.l.b16 %v133
    %v408 = vunpack.c.l.b16 %v134
    %v409 = vunpack.c.l.b16 %v135
    %v410 = vunpack.c.l.b16 %v136
    %v411 = vunpack.c.l.b16 %v137
    %v412 = vunpack.c.l.b16 %v138
    %v413 = vunpack.c.l.b16 %v139
    %v414 = vunpack.c.l.b16 %v140
    %v415 = vunpack.c.l.b16 %v141
    %v416 = vunpack.c.l.b16 %v142
    %v417 = vunpack.c.l.b16 %v143
    %v418 = vunpack.c.l.b16 %v144
    %v419 = vunpack.c.l.b16 %v145
    %v420 = vunpack.c.l.b16 %v146
    %v421 = vunpack.c.l.b16 %v147
    %v422 = vunpack.c.l.b16 %v148
    %v423 = vunpack.c.l.b16 %v149
    %v424 = vunpack.c.l.b16 %v150
    %v425 = vunpack.c.l.b16 %v151
    %v426 = vunpack.c.l.b16 %v152
    %v427 = vunpack.c.l.b16 %v153
    %v428 = vunpack.c.l.b16 %v154
    %v429 = vunpack.c.l.b16 %v155
    %v430 = vunpack.c.l.b16 %v156
    %v431 = vunpack.c.l.b16 %v157
    %v432 = vunpack.c.l.b16 %v158
    %v433 = vunpack.c.l.b16 %v159
    %v434 = vunpack.c.l.b16 %v160
    %v435 = vunpack.c.l.b16 %v161
    %v436 = vunpack.c.l.b16 %v162
    %v437 = vunpack.c.l.b16 %v163
    %v438 = vunpack.c.l.b16 %v164
    %v439 = vunpack.c.l.b16 %v165
    %v440 = vunpack.c.l.b16 %v166
    %v441 = vunpack.c.l.b16 %v167
    %v442 = vunpack.c.l.b16 %v168
    %v443 = vunpack.c.l.b16 %v169
    %v444 = vunpack.c.l.b16 %v170
    %v445 = vunpack.c.l.b16 %v171
    %v446 = vunpack.c.l.b16 %v172
    %v447 = vunpack.c.l.b16 %v173
    %v448 = vunpack.c.l.b16 %v174
    %v449 = vunpack.c.l.b16 %v175
    %v450 = vunpack.c.l.b16 %v176
    %v451 = vunpack.c.l.b16 %v177
    %v452 = vunpack.c.l.b16 %v178
    %v453 = vunpack.c.l.b16 %v179
    %v454 = vunpack.c.l.b16 %v180
    %v455 = vunpack.c.l.b16 %v181
    %v456 = vunpack.c.l.b16 %v182
    %v457 = vunpack.c.l.b16 %v183
    %v458 = vunpack.c.l.b16 %v184
    %v459 = vunpack.c.l.b16 %v185
    %v460 = vunpack.c.l.b16 %v186
    %v461 = vunpack.c.l.b16 %v187
    %v462 = vunpack.c.l.b16 %v188
    %v463 = vunpack.c.l.b16 %v189
    %v464 = vunpack.c.l.b16 %v190
    %v465 = vunpack.c.l.b16 %v191
    %v466 = vunpack.c.l.b16 %v192
    %v467 = vunpack.c.l.b16 %v193
    %v468 = vunpack.c.l.b16 %v194
    %v469 = vunpack.c.l.b16 %v195
    %v470 = vunpack.c.l.b16 %v196
    %v471 = vunpack.c.l.b16 %v197
    %v472 = vunpack.c.l.b16 %v198
    %v473 = vunpack.c.l.b16 %v199
    %v474 = vunpack.c.l.b16 %v200
    %v475 = vunpack.c.l.b16 %v201
    %v476 = vunpack.c.l.b16 %v202
    %v477 = vunpack.c.l.b16 %v203
    %v478 = vunpack.c.l.b16 %v204
    %v479 = vunpack.c.l.b16 %v205
    %v480 = vunpack.c.l.b16 %v206
    %v481 = vunpack.c.l.b16 %v207
    %v482 = vunpack.c.l.b16 %v208
    %v483 = vunpack.c.l.b16 %v209
    %v484 = vunpack.c.l.b16 %v210
    %v485 = vunpack.c.l.b16 %v211
    %v486 = vunpack.c.l.b16 %v212
    %v487 = vunpack.c.l.b16 %v213
    %v488 = vunpack.c.l.b16 %v214
    %v489 = vunpack.c.l.b16 %v215
    %v490 = vunpack.c.l.b16 %v216
    %v491 = vunpack.c.l.b16 %v217
    %v492 = vunpack.c.l.b16 %v218
    %v493 = vunpack.c.l.b16 %v219
    %v494 = vunpack.c.l.b16 %v220
    %v495 = vunpack.c.l.b16 %v221
    %v496 = vpack.c.b16 %v369, %v368
    %v497 = vpack.c.b16 %v371, %v370
    %v498 = vpack.c.b16 %v373, %v372
    %v499 = vpack.c.b16 %v375, %v374
    %v500 = vpack.c.b16 %v377, %v376
    %v501 = vpack.c.b16 %v379, %v378
    %v502 = vpack.c.b16 %v381, %v380
    %v503 = vpack.c.b16 %v383, %v382
    %v504 = vpack.c.b16 %v385, %v384
    %v505 = vpack.c.b16 %v387, %v386
    %v506 = vpack.c.b16 %v389, %v388
    %v507 = vpack.c.b16 %v391, %v390
    %v508 = vpack.c.b16 %v393, %v392
    %v509 = vpack.c.b16 %v395, %v394
    %v510 = vpack.c.b16 %v397, %v396
    %v511 = vpack.c.b16 %v399, %v398
    %v512 = vpack.c.b16 %v401, %v400
    %v513 = vpack.c.b16 %v403, %v402
    %v514 = vpack.c.b16 %v405, %v404
    %v515 = vpack.c.b16 %v407, %v406
    %v516 = vpack.c.b16 %v409, %v408
    %v517 = vpack.c.b16 %v411, %v410
    %v518 = vpack.c.b16 %v413, %v412
    %v519 = vpack.c.b16 %v415, %v414
    %v520 = vpack.c.b16 %v417, %v416
    %v521 = vpack.c.b16 %v419, %v418
    %v522 = vpack.c.b16 %v421, %v420
    %v523 = vpack.c.b16 %v423, %v422
    %v524 = vpack.c.b16 %v425, %v424
    %v525 = vpack.c.b16 %v427, %v426
    %v526 = vpack.c.b16 %v429, %v428
    %v527 = vpack.c.b16 %v431, %v430
    %v528 = vpack.c.b16 %v433, %v432
    %v529 = vpack.c.b16 %v435, %v434
    %v530 = vpack.c.b16 %v437, %v436
    %v531 = vpack.c.b16 %v439, %v438
    %v532 = vpack.c.b16 %v441, %v440
    %v533 = vpack.c.b16 %v443, %v442
    %v534 = vpack.c.b16 %v445, %v444
    %v535 = vpack.c.b16 %v447, %v446
    %v536 = vpack.c.b16 %v449, %v448
    %v537 = vpack.c.b16 %v451, %v450
    %v538 = vpack.c.b16 %v453, %v452
    %v539 = vpack.c.b16 %v455, %v454
    %v540 = vpack.c.b16 %v457, %v456
    %v541 = vpack.c.b16 %v459, %v458
    %v542 = vpack.c.b16 %v461, %v460
    %v543 = vpack.c.b16 %v463, %v462
    %v544 = vpack.c.b16 %v465, %v464
    %v545 = vpack.c.b16 %v467, %v466
    %v546 = vpack.c.b16 %v469, %v468
    %v547 = vpack.c.b16 %v471, %v470
    %v548 = vpack.c.b16 %v473, %v472
    %v549 = vpack.c.b16 %v475, %v474
    %v550 = vpack.c.b16 %v477, %v476
    %v551 = vpack.c.b16 %v479, %v478
    %v552 = vpack.c.b16 %v481, %v480
    %v553 = vpack.c.b16 %v483, %v482
    %v554 = vpack.c.b16 %v485, %v484
    %v555 = vpack.c.b16 %v487, %v486
    %v556 = vpack.c.b16 %v489, %v488
    %v557 = vpack.c.b16 %v491, %v490
    %v558 = vpack.c.b16 %v493, %v492
    %v559 = vpack.c.b16 %v495, %v494
    %624 = vmatpush.bf16.msra.mxu0 %v503
    %625 = vmatpush.bf16.msra.mxu0 %v502
    %626 = vmatpush.bf16.msra.mxu0 %v501
    %627 = vmatpush.bf16.msra.mxu0 %v500
    %628 = vmatpush.bf16.msra.mxu0 %v499
    %629 = vmatpush.bf16.msra.mxu0 %v498
    %630 = vmatpush.bf16.msra.mxu0 %v497
    %631 = vmatpush.bf16.msra.mxu0 %v496
    %632 = vmatmul.bf16.gmra.mxu0 %v224
    %v633 = vpop.f32.mrf.mxu0
    %v634 = vadd.f32 0.0, %v633
    %v635 = vpop.f32.mrf.mxu0
    %636 = vdwg.mxu0
    %637 = vmatpush.bf16.msra.mxu0 %v511
    %638 = vmatpush.bf16.msra.mxu0 %v510
    %639 = vmatpush.bf16.msra.mxu0 %v509
    %640 = vmatpush.bf16.msra.mxu0 %v508
    %641 = vmatpush.bf16.msra.mxu0 %v507
    %642 = vmatpush.bf16.msra.mxu0 %v506
    %643 = vmatpush.bf16.msra.mxu0 %v505
    %644 = vmatpush.bf16.msra.mxu0 %v504
    %645 = vmatmul.bf16.gmra.mxu0 %v225
    %v646 = vpop.f32.mrf.mxu0
    %v647 = vadd.f32 %v634, %v646
    %v648 = vpop.f32.mrf.mxu0
    %649 = vdwg.mxu0
    %650 = vmatpush.bf16.msra.mxu0 %v519
    %651 = vmatpush.bf16.msra.mxu0 %v518
    %652 = vmatpush.bf16.msra.mxu0 %v517
    %653 = vmatpush.bf16.msra.mxu0 %v516
    %654 = vmatpush.bf16.msra.mxu0 %v515
    %655 = vmatpush.bf16.msra.mxu0 %v514
    %656 = vmatpush.bf16.msra.mxu0 %v513
    %657 = vmatpush.bf16.msra.mxu0 %v512
    %658 = vmatmul.bf16.gmra.mxu0 %v226
    %v659 = vpop.f32.mrf.mxu0
    %v660 = vadd.f32 %v647, %v659
    %v661 = vpop.f32.mrf.mxu0
    %662 = vdwg.mxu0
    %663 = vmatpush.bf16.msra.mxu0 %v527
    %664 = vmatpush.bf16.msra.mxu0 %v526
    %665 = vmatpush.bf16.msra.mxu0 %v525
    %666 = vmatpush.bf16.msra.mxu0 %v524
    %667 = vmatpush.bf16.msra.mxu0 %v523
    %668 = vmatpush.bf16.msra.mxu0 %v522
    %669 = vmatpush.bf16.msra.mxu0 %v521
    %670 = vmatpush.bf16.msra.mxu0 %v520
    %671 = vmatmul.bf16.gmra.mxu0 %v227
    %v672 = vpop.f32.mrf.mxu0
    %v673 = vadd.f32 %v660, %v672
    %v674 = vpop.f32.mrf.mxu0
    %675 = vdwg.mxu0
    %676 = vmatpush.bf16.msra.mxu0 %v535
    %677 = vmatpush.bf16.msra.mxu0 %v534
    %678 = vmatpush.bf16.msra.mxu0 %v533
    %679 = vmatpush.bf16.msra.mxu0 %v532
    %680 = vmatpush.bf16.msra.mxu0 %v531
    %681 = vmatpush.bf16.msra.mxu0 %v530
    %682 = vmatpush.bf16.msra.mxu0 %v529
    %683 = vmatpush.bf16.msra.mxu0 %v528
    %684 = vmatmul.bf16.gmra.mxu0 %v228
    %v685 = vpop.f32.mrf.mxu0
    %v686 = vadd.f32 %v673, %v685
    %v687 = vpop.f32.mrf.mxu0
    %688 = vdwg.mxu0
    %689 = vmatpush.bf16.msra.mxu0 %v543
    %690 = vmatpush.bf16.msra.mxu0 %v542
    %691 = vmatpush.bf16.msra.mxu0 %v541
    %692 = vmatpush.bf16.msra.mxu0 %v540
    %693 = vmatpush.bf16.msra.mxu0 %v539
    %694 = vmatpush.bf16.msra.mxu0 %v538
    %695 = vmatpush.bf16.msra.mxu0 %v537
    %696 = vmatpush.bf16.msra.mxu0 %v536
    %697 = vmatmul.bf16.gmra.mxu0 %v229
    %v698 = vpop.f32.mrf.mxu0
    %v699 = vadd.f32 %v686, %v698
    %v700 = vpop.f32.mrf.mxu0
    %701 = vdwg.mxu0
    %702 = vmatpush.bf16.msra.mxu0 %v551
    %703 = vmatpush.bf16.msra.mxu0 %v550
    %704 = vmatpush.bf16.msra.mxu0 %v549
    %705 = vmatpush.bf16.msra.mxu0 %v548
    %706 = vmatpush.bf16.msra.mxu0 %v547
    %707 = vmatpush.bf16.msra.mxu0 %v546
    %708 = vmatpush.bf16.msra.mxu0 %v545
    %709 = vmatpush.bf16.msra.mxu0 %v544
    %710 = vmatmul.bf16.gmra.mxu0 %v230
    %v711 = vpop.f32.mrf.mxu0
    %v712 = vadd.f32 %v699, %v711
    %v713 = vpop.f32.mrf.mxu0
    %714 = vdwg.mxu0
    %715 = vmatpush.bf16.msra.mxu0 %v559
    %716 = vmatpush.bf16.msra.mxu0 %v558
    %717 = vmatpush.bf16.msra.mxu0 %v557
    %718 = vmatpush.bf16.msra.mxu0 %v556
    %719 = vmatpush.bf16.msra.mxu0 %v555
    %720 = vmatpush.bf16.msra.mxu0 %v554
    %721 = vmatpush.bf16.msra.mxu0 %v553
    %722 = vmatpush.bf16.msra.mxu0 %v552
    %723 = vmatmul.bf16.gmra.mxu0 %v231
    %v724 = vpop.f32.mrf.mxu0
    %v725 = vadd.f32 %v712, %v724
    %v726 = vpop.f32.mrf.mxu0
    %727 = vdwg.mxu0
    %v728 = vadd.f32 %v92, %v725
    %729 = vst [vmem:[#allocation2] sm:$0x3] %v728
    // Predicated region
    $region46: #{tpu_custom_call.1} parent=1 // pred_check
      %p730 = pneg %p87
    $region47: #{tpu_custom_call.1} parent=1 // pred_check_branch
      %732 = sbr.rel (%p730) target = $region49
    $region48: #{tpu_custom_call.1} parent=1 // pred_region
      %v733 = vld [vmem:[#allocation2] sm:$0x3]
      %v734 = vld [vmem:[%s3] sm:$0x1]
      %v736 = vperm.slane %v734, 0
      %v738 = vadd.f32 %v733, %v736
      %v739 = vpack.c.bf16 %v738, %v738
      %v740 = vld [vmem:[#allocation9] sm:$0xff]
      %v741 = vld [vmem:[#allocation9 + $0x8] sm:$0xff]
      %v742 = vld [vmem:[#allocation9 + $0x10] sm:$0xff]
      %v743 = vld [vmem:[#allocation9 + $0x18] sm:$0xff]
      %v744 = vld [vmem:[#allocation9 + $0x20] sm:$0xff]
      %v745 = vld [vmem:[#allocation9 + $0x28] sm:$0xff]
      %v746 = vld [vmem:[#allocation9 + $0x30] sm:$0xff]
      %v747 = vld [vmem:[#allocation9 + $0x38] sm:$0xff]
      %v748 = vld [vmem:[#allocation9 + $0x40] sm:$0xff]
      %v749 = vld [vmem:[#allocation9 + $0x48] sm:$0xff]
      %v750 = vld [vmem:[#allocation9 + $0x50] sm:$0xff]
      %v751 = vld [vmem:[#allocation9 + $0x58] sm:$0xff]
      %v752 = vld [vmem:[#allocation9 + $0x60] sm:$0xff]
      %v753 = vld [vmem:[#allocation9 + $0x68] sm:$0xff]
      %v754 = vld [vmem:[#allocation9 + $0x70] sm:$0xff]
      %v755 = vld [vmem:[#allocation9 + $0x78] sm:$0xff]
      %v756 = vld [vmem:[%s5] sm:$0x3]
      %v758 = vperm.slane %v756, 0
      %v759 = vperm.slane %v756, 1
      %v778 = vunpack.c.l.b16 %v740
      %v779 = vunpack.c.h.b16 %v740
      %v780 = vunpack.c.l.b16 %v741
      %v781 = vunpack.c.h.b16 %v741
      %v782 = vunpack.c.l.b16 %v742
      %v783 = vunpack.c.h.b16 %v742
      %v784 = vunpack.c.l.b16 %v743
      %v785 = vunpack.c.h.b16 %v743
      %v786 = vunpack.c.l.b16 %v744
      %v787 = vunpack.c.h.b16 %v744
      %v788 = vunpack.c.l.b16 %v745
      %v789 = vunpack.c.h.b16 %v745
      %v790 = vunpack.c.l.b16 %v746
      %v791 = vunpack.c.h.b16 %v746
      %v792 = vunpack.c.l.b16 %v747
      %v793 = vunpack.c.h.b16 %v747
      %v794 = vunpack.c.l.b16 %v748
      %v795 = vunpack.c.h.b16 %v748
      %v796 = vunpack.c.l.b16 %v749
      %v797 = vunpack.c.h.b16 %v749
      %v798 = vunpack.c.l.b16 %v750
      %v799 = vunpack.c.h.b16 %v750
      %v800 = vunpack.c.l.b16 %v751
      %v801 = vunpack.c.h.b16 %v751
      %v802 = vunpack.c.l.b16 %v752
      %v803 = vunpack.c.h.b16 %v752
      %v804 = vunpack.c.l.b16 %v753
      %v805 = vunpack.c.h.b16 %v753
      %v806 = vunpack.c.l.b16 %v754
      %v807 = vunpack.c.h.b16 %v754
      %v808 = vunpack.c.l.b16 %v755
      %v809 = vunpack.c.h.b16 %v755
      %v810 = vpack.c.b16 %v780, %v778
      %v811 = vpack.c.b16 %v781, %v779
      %v812 = vpack.c.b16 %v784, %v782
      %v813 = vpack.c.b16 %v785, %v783
      %v814 = vpack.c.b16 %v788, %v786
      %v815 = vpack.c.b16 %v789, %v787
      %v816 = vpack.c.b16 %v792, %v790
      %v817 = vpack.c.b16 %v793, %v791
      %v818 = vpack.c.b16 %v796, %v794
      %v819 = vpack.c.b16 %v797, %v795
      %v820 = vpack.c.b16 %v800, %v798
      %v821 = vpack.c.b16 %v801, %v799
      %v822 = vpack.c.b16 %v804, %v802
      %v823 = vpack.c.b16 %v805, %v803
      %v824 = vpack.c.b16 %v808, %v806
      %v825 = vpack.c.b16 %v809, %v807
      %842 = vmatpush.bf16.msra.mxu0 %v824
      %843 = vmatpush.bf16.msra.mxu0 %v822
      %844 = vmatpush.bf16.msra.mxu0 %v820
      %845 = vmatpush.bf16.msra.mxu0 %v818
      %846 = vmatpush.bf16.msra.mxu0 %v816
      %847 = vmatpush.bf16.msra.mxu0 %v814
      %848 = vmatpush.bf16.msra.mxu0 %v812
      %849 = vmatpush.bf16.msra.mxu0 %v810
      %850 = vmatmul.bf16.gmra.mxu0 %v739
      %v851 = vpop.f32.mrf.mxu0
      %v852 = vadd.f32 %v758, %v851
      %v853 = vpop.f32.mrf.mxu0
      %854 = vdwg.mxu0
      %855 = vmatpush.bf16.msra.mxu0 %v825
      %856 = vmatpush.bf16.msra.mxu0 %v823
      %857 = vmatpush.bf16.msra.mxu0 %v821
      %858 = vmatpush.bf16.msra.mxu0 %v819
      %859 = vmatpush.bf16.msra.mxu0 %v817
      %860 = vmatpush.bf16.msra.mxu0 %v815
      %861 = vmatpush.bf16.msra.mxu0 %v813
      %862 = vmatpush.bf16.msra.mxu0 %v811
      %863 = vmatmul.bf16.gmra.mxu0 %v739
      %v864 = vpop.f32.mrf.mxu0
      %v865 = vadd.f32 %v759, %v864
      %v866 = vpop.f32.mrf.mxu0
      %867 = vdwg.mxu0
      %v868 = vmul.f32 %v865, 0.5
      %v869 = vmul.f32 %v868, 1.442695
      %v870 = vpow.pop %v869
      %v871 = vld [vmem:[#allocation6] sm:$0x3]
      %v872 = vmul.f32 %v871, %v870
      %v873 = vadd.f32 %v852, %v872
      %874 = vst [vmem:[#allocation11] sm:$0x3] %v873
      %875 = vst [vmem:[#allocation12] sm:$0x3] %v852
      %876 = vst [vmem:[#allocation14] sm:$0x3] %v865
    $region49: #{tpu_custom_call.1} parent=1 // pred_fallthru
      _
    // Predicated region
    $region50: #{tpu_custom_call.1} parent=1 // pred_check
      _
    $region51: #{tpu_custom_call.1} parent=1 // pred_check_branch
      %878 = sbr.rel (0) target = $region53
    $region52: #{tpu_custom_call.1} parent=1 // pred_region
      %880 = vsyncadd [#allocation5], 0
      %s882 = sshll.u32 [#allocation11], 4
      %s883 = int_to_ptr.vmem [resolvable:$true] %s882
      %s884 = sshll.u32 %s6, 4
      %s885 = int_to_ptr.hbm [resolvable:$true] %s884
      %887 = dma.vmem_to_hbm [thread:$0]  %s883, 32, %s885, [#allocation5]
    $region53: #{tpu_custom_call.1} parent=1 // pred_fallthru
      _
    // Predicated region
    $region54: #{tpu_custom_call.1} parent=1 // pred_check
      _
    $region55: #{tpu_custom_call.1} parent=1 // pred_check_branch
      %889 = sbr.rel (0) target = $region57
    $region56: #{tpu_custom_call.1} parent=1 // pred_region
      %891 = vsyncadd [#allocation13], 0
      %s893 = sshll.u32 [#allocation12], 4
      %s894 = int_to_ptr.vmem [resolvable:$true] %s893
      %s895 = sshll.u32 %s7, 4
      %s896 = int_to_ptr.hbm [resolvable:$true] %s895
      %898 = dma.vmem_to_hbm [thread:$0]  %s894, 32, %s896, [#allocation13]
    $region57: #{tpu_custom_call.1} parent=1 // pred_fallthru
      _
    // Predicated region
    $region58: #{tpu_custom_call.1} parent=1 // pred_check
      _
    $region59: #{tpu_custom_call.1} parent=1 // pred_check_branch
      %900 = sbr.rel (0) target = $region61
    $region60: #{tpu_custom_call.1} parent=1 // pred_region
      %902 = vsyncadd [#allocation13], 0
      %s904 = sshll.u32 [#allocation14], 4
      %s905 = int_to_ptr.vmem [resolvable:$true] %s904
      %s906 = sshll.u32 %s8, 4
      %s907 = int_to_ptr.hbm [resolvable:$true] %s906
      %909 = dma.vmem_to_hbm [thread:$0]  %s905, 32, %s907, [#allocation13]
    $region61: #{tpu_custom_call.1} parent=1 // pred_fallthru
      _
    // Predicated region
    $region62: #{tpu_custom_call.1} parent=1 // pred_check
      _
    $region63: #{tpu_custom_call.1} parent=1 // pred_check_branch
      %911 = sbr.rel (0) target = $region65
    $region64: #{tpu_custom_call.1} parent=1 // pred_region
      %913 = dma.done [#allocation5], 32
    $region65: #{tpu_custom_call.1} parent=1 // pred_fallthru
      _
    // Predicated region
    $region66: #{tpu_custom_call.1} parent=1 // pred_check
      _
    $region67: #{tpu_custom_call.1} parent=1 // pred_check_branch
      %915 = sbr.rel (0) target = $region69
    $region68: #{tpu_custom_call.1} parent=1 // pred_region
      %917 = dma.done [#allocation13], 32
    $region69: #{tpu_custom_call.1} parent=1 // pred_fallthru
      _
    // Predicated region
    $region70: #{tpu_custom_call.1} parent=1 // pred_check
      _
    $region71: #{tpu_custom_call.1} parent=1 // pred_check_branch
      %919 = sbr.rel (0) target = $region73
    $region72: #{tpu_custom_call.1} parent=1 // pred_region
      %921 = dma.done [#allocation13], 32
    $region73: #{tpu_custom_call.1} parent=1 // pred_fallthru
      _
    %922 = vsyncpa [#allocation4], 1
    %923 = vsyncpa [#allocation7], 1
    %924 = vsyncpa [#allocation10], 1
    %925 = vsyncpa [#allocation5], 1
    %926 = vsyncpa [#allocation13], 1

</llo_original>
